<compile_context>
chip_gen: v7x
topology: tpu7x:2x2x1
jax: 0.10.0
libtpu: 0.0.40
codegen_flags: <defaults>
</compile_context>

<pallas_src>
import jax
import jax.numpy as jnp
from jax import lax
from jax.experimental import pallas as pl
from jax.experimental.pallas import tpu as pltpu


# ---------------------------------------------------------------------------
# Kernel
# ---------------------------------------------------------------------------
def _head_kernel(x_ref,            # (1, C, T)   feature rows (NCHW-flattened)
                 w_reg_ref,        # (2C, C)     bf16: [hm_reg ; box_reg] 1x1 convs
                 b_reg_ref,        # (2C, 1)     f32
                 w_out_ref,        # (5, 2C)     bf16: block-diag [hm_out ; box_out]
                 b_out_ref,        # (5, 1)      f32
                 hm_ref,           # (1, 1, T)
                 diff_ref):        # (1, 4, T)
    c = w_reg_ref.shape[1]

    # Activations in bf16 for the MXU, accumulate in f32.
    x = x_ref[0].astype(jnp.bfloat16)                                # (C, T)

    # Fused reg convs: rows [0:C] -> hm path, rows [C:2C] -> box path.
    reg = jnp.dot(w_reg_ref[...], x,
                  preferred_element_type=jnp.float32) + b_reg_ref[...]  # (2C, T) f32

    # Spec asymmetry: box_reg has a trailing Sigmoid, hm_reg does not.
    row = lax.broadcasted_iota(jnp.int32, reg.shape, 0)
    act = jnp.where(row < c, reg, jax.nn.sigmoid(reg))               # (2C, T) f32

    # Fused output convs (block-diagonal) + final sigmoids (f32 on the EUP).
    out = jnp.dot(w_out_ref[...], act.astype(jnp.bfloat16),
                  preferred_element_type=jnp.float32) + b_out_ref[...]  # (5, T) f32
    out = jax.nn.sigmoid(out)

    hm_ref[0] = out[0:1].astype(hm_ref.dtype)                        # (1, T)
    diff_ref[0] = out[1:5].astype(diff_ref.dtype)                    # (4, T)


# ---------------------------------------------------------------------------
# Wrapper
# ---------------------------------------------------------------------------
def _pick_tile(spatial, max_tile=2048):
    """Largest spatial tile: whole row if it fits, else a 128-multiple divisor."""
    if spatial <= max_tile:
        return spatial
    for t in range(max_tile, 127, -128):
        if spatial % t == 0 and t % 128 == 0:
            return t
    return spatial


def centernet_v1_forward(fp_nchw, params, *, anchor_size=1, row_tile=None):
    """Runs the CenterNetV1 heads on a feature map fp (B, C, H, W).

    Returns (anchors, diffmaps, heatmaps), matching the torch forward:
      anchors  : (4, H, W)     float32
      diffmaps : (B, 4, H, W)  float32  box_out(sigmoid(box_reg(fp)))
      heatmaps : (B, 1, H, W)  float32  sigmoid(hm_out(hm_reg(fp)))
    """
    B, C, H, W = fp_nchw.shape
    spatial = H * W
    if row_tile is None:
        row_tile = _pick_tile(spatial)
    assert spatial % row_tile == 0
    assert row_tile == spatial or row_tile % 128 == 0

    # NCHW -> (B, C, H*W): a pure reshape, no HBM transpose round-trip.
    x = fp_nchw.reshape(B, C, spatial)

    # --- pack the head weights (conv-style (Cout, Cin)) ------------------
    w_reg = jnp.concatenate([params["w_hmreg"], params["w_boxreg"]],
                            axis=0).astype(jnp.bfloat16)                 # (2C, C)
    b_reg = jnp.concatenate([params["b_hmreg"], params["b_boxreg"]],
                            axis=0).reshape(2 * C, 1).astype(jnp.float32)

    w_out = jnp.zeros((5, 2 * C), jnp.float32)
    w_out = w_out.at[0:1, 0:C].set(params["w_hmout"])
    w_out = w_out.at[1:5, C:2 * C].set(params["w_boxout"])
    w_out = w_out.astype(jnp.bfloat16)                                   # (5, 2C)
    b_out = jnp.concatenate([params["b_hmout"], params["b_boxout"]],
                            axis=0).reshape(5, 1).astype(jnp.float32)

    grid = (B, spatial // row_tile)

    def full_spec(shape):
        return pl.BlockSpec(shape, lambda b, i: (0, 0))

    heat_flat, diff_flat = pl.pallas_call(
        _head_kernel,
        out_shape=(
            jax.ShapeDtypeStruct((B, 1, spatial), jnp.float32),
            jax.ShapeDtypeStruct((B, 4, spatial), jnp.float32),
        ),
        grid_spec=pltpu.PrefetchScalarGridSpec(
            num_scalar_prefetch=0,
            grid=grid,
            in_specs=[
                pl.BlockSpec((1, C, row_tile), lambda b, i: (b, 0, i)),   # x
                full_spec((2 * C, C)),                                    # w_reg
                full_spec((2 * C, 1)),                                    # b_reg
                full_spec((5, 2 * C)),                                    # w_out
                full_spec((5, 1)),                                        # b_out
            ],
            out_specs=[
                pl.BlockSpec((1, 1, row_tile), lambda b, i: (b, 0, i)),   # heatmaps
                pl.BlockSpec((1, 4, row_tile), lambda b, i: (b, 0, i)),   # diffmaps
            ],
        ),
        compiler_params=pltpu.CompilerParams(
            dimension_semantics=("parallel", "parallel")),
    )(x, w_reg, b_reg, w_out, b_out)

    # --- anchors: constant of (H, W, size) -> plain jnp, no kernel launch.
    grid_y = lax.broadcasted_iota(jnp.float32, (H, W), 0) / float(H)
    grid_x = lax.broadcasted_iota(jnp.float32, (H, W), 1) / float(W)
    box_w = jnp.full((H, W), float(anchor_size) / float(W), jnp.float32)
    box_h = jnp.full((H, W), float(anchor_size) / float(H), jnp.float32)
    anchors = jnp.stack([grid_x, grid_y, box_w, box_h], axis=0)

    heatmaps = heat_flat.reshape(B, 1, H, W)
    diffmaps = diff_flat.reshape(B, 4, H, W)
    return anchors, diffmaps, heatmaps


def init_params(key, channels):
    """Deterministic synthetic weights, conv-style (C_out, C_in) orientation."""
    ks = jax.random.split(key, 8)
    scale = 1.0 / jnp.sqrt(channels)
    return {
        "w_hmreg":  jax.random.normal(ks[0], (channels, channels), jnp.float32) * scale,
        "b_hmreg":  jax.random.normal(ks[1], (channels,), jnp.float32) * 0.01,
        "w_hmout":  jax.random.normal(ks[2], (1, channels), jnp.float32) * scale,
        "b_hmout":  jax.random.normal(ks[3], (1,), jnp.float32) * 0.01,
        "w_boxreg": jax.random.normal(ks[4], (channels, channels), jnp.float32) * scale,
        "b_boxreg": jax.random.normal(ks[5], (channels,), jnp.float32) * 0.01,
        "w_boxout": jax.random.normal(ks[6], (4, channels), jnp.float32) * scale,
        "b_boxout": jax.random.normal(ks[7], (4,), jnp.float32) * 0.01,
    }


if __name__ == "__main__":
    key = jax.random.PRNGKey(0)
    k_x, k_p = jax.random.split(key)

    B, C, H, W = 2, 32, 16, 16          # fp[out_idx] feature map (NCHW)
    fp = jax.random.normal(k_x, (B, C, H, W), jnp.float32)
    params = init_params(k_p, C)

    anchors, diffmaps, heatmaps = centernet_v1_forward(fp, params)
    jax.block_until_ready((anchors, diffmaps, heatmaps))

    assert anchors.shape == (4, H, W)
    assert diffmaps.shape == (B, 4, H, W)
    assert heatmaps.shape == (B, 1, H, W)
    assert bool(jnp.all((heatmaps >= 0) & (heatmaps <= 1)))
    assert bool(jnp.all((diffmaps >= 0) & (diffmaps <= 1)))
    print("KERNEL_OK")
</pallas_src>

<mosaic_0001>
module attributes {stable_mosaic.version = 11 : i64} {
  func.func @_head_kernel(%arg0: i32, %arg1: i32, %arg2: memref<1x32x256xf32, #tpu.memory_space<vmem>>, %arg3: memref<64x32xbf16, #tpu.memory_space<vmem>>, %arg4: memref<64x1xf32, #tpu.memory_space<vmem>>, %arg5: memref<5x64xbf16, #tpu.memory_space<vmem>>, %arg6: memref<5x1xf32, #tpu.memory_space<vmem>>, %arg7: memref<1x1x256xf32, #tpu.memory_space<vmem>>, %arg8: memref<1x4x256xf32, #tpu.memory_space<vmem>>) attributes {dimension_semantics = [#tpu.dimension_semantics<parallel>, #tpu.dimension_semantics<parallel>], iteration_bounds = array<i64: 2, 1>, scalar_prefetch = 0 : i64, scratch_operands = 0 : i64, tpu.core_type = #tpu.core_type<tc>, window_params = [{transform_indices = @transform_0, window_bounds = array<i64: 1, 32, 256>}, {pipeline_mode = #tpu.pipeline_mode<synchronous>, transform_indices = @transform_1, window_bounds = array<i64: 64, 32>}, {pipeline_mode = #tpu.pipeline_mode<synchronous>, transform_indices = @transform_2, window_bounds = array<i64: 64, 1>}, {pipeline_mode = #tpu.pipeline_mode<synchronous>, transform_indices = @transform_3, window_bounds = array<i64: 5, 64>}, {pipeline_mode = #tpu.pipeline_mode<synchronous>, transform_indices = @transform_4, window_bounds = array<i64: 5, 1>}, {transform_indices = @transform_5, window_bounds = array<i64: 1, 1, 256>}, {transform_indices = @transform_6, window_bounds = array<i64: 1, 4, 256>}]} {
    %c0 = arith.constant 0 : index
    %c0_0 = arith.constant 0 : index
    %c0_1 = arith.constant 0 : index
    %0 = vector.load %arg2[%c0, %c0_0, %c0_1] : memref<1x32x256xf32, #tpu.memory_space<vmem>>, vector<1x32x256xf32>
    %1 = vector.shape_cast %0 : vector<1x32x256xf32> to vector<32x256xf32>
    %2 = arith.truncf %1 : vector<32x256xf32> to vector<32x256xbf16>
    %c0_2 = arith.constant 0 : index
    %c0_3 = arith.constant 0 : index
    %3 = vector.load %arg3[%c0_2, %c0_3] : memref<64x32xbf16, #tpu.memory_space<vmem>>, vector<64x32xbf16>
    %cst = arith.constant dense<0.000000e+00> : vector<64x256xf32>
    %4 = tpu.matmul %3, %2, %cst {dimension_numbers = #tpu.dot_dimension_numbers<[1], [0], [0], [1], [0, 0, 1, 1], [], []>} : vector<64x32xbf16>, vector<32x256xbf16>, vector<64x256xf32> -> vector<64x256xf32>
    %c0_4 = arith.constant 0 : index
    %c0_5 = arith.constant 0 : index
    %5 = vector.load %arg4[%c0_4, %c0_5] : memref<64x1xf32, #tpu.memory_space<vmem>>, vector<64x1xf32>
    %6 = vector.broadcast %5 : vector<64x1xf32> to vector<64x256xf32>
    %7 = arith.addf %4, %6 : vector<64x256xf32>
    %8 = tpu.iota {dimensions = array<i32: 0>} : vector<64x256xi32>
    %c32_i32 = arith.constant 32 : i32
    %9 = vector.broadcast %c32_i32 : i32 to vector<64x256xi32>
    %10 = arith.cmpi slt, %8, %9 : vector<64x256xi32>
    %11 = arith.negf %7 : vector<64x256xf32>
    %12 = math.exp %11 : vector<64x256xf32>
    %cst_6 = arith.constant 1.000000e+00 : f32
    %13 = vector.broadcast %cst_6 : f32 to vector<64x256xf32>
    %14 = arith.addf %13, %12 : vector<64x256xf32>
    %15 = arith.divf %13, %14 : vector<64x256xf32>
    %16 = arith.select %10, %7, %15 : vector<64x256xi1>, vector<64x256xf32>
    %c0_7 = arith.constant 0 : index
    %c0_8 = arith.constant 0 : index
    %17 = vector.load %arg5[%c0_7, %c0_8] : memref<5x64xbf16, #tpu.memory_space<vmem>>, vector<5x64xbf16>
    %18 = arith.truncf %16 : vector<64x256xf32> to vector<64x256xbf16>
    %cst_9 = arith.constant dense<0.000000e+00> : vector<5x256xf32>
    %19 = tpu.matmul %17, %18, %cst_9 {dimension_numbers = #tpu.dot_dimension_numbers<[1], [0], [0], [1], [0, 0, 1, 1], [], []>} : vector<5x64xbf16>, vector<64x256xbf16>, vector<5x256xf32> -> vector<5x256xf32>
    %c0_10 = arith.constant 0 : index
    %c0_11 = arith.constant 0 : index
    %20 = vector.load %arg6[%c0_10, %c0_11] : memref<5x1xf32, #tpu.memory_space<vmem>>, vector<5x1xf32>
    %21 = vector.broadcast %20 : vector<5x1xf32> to vector<5x256xf32>
    %22 = arith.addf %19, %21 : vector<5x256xf32>
    %23 = arith.negf %22 : vector<5x256xf32>
    %24 = math.exp %23 : vector<5x256xf32>
    %cst_12 = arith.constant 1.000000e+00 : f32
    %25 = vector.broadcast %cst_12 : f32 to vector<5x256xf32>
    %26 = arith.addf %25, %24 : vector<5x256xf32>
    %27 = arith.divf %25, %26 : vector<5x256xf32>
    %28 = vector.extract_strided_slice %27 {offsets = [0, 0], sizes = [1, 256], strides = [1, 1]} : vector<5x256xf32> to vector<1x256xf32>
    %c0_13 = arith.constant 0 : index
    %c0_14 = arith.constant 0 : index
    %c0_15 = arith.constant 0 : index
    %29 = vector.load %arg7[%c0_13, %c0_14, %c0_15] : memref<1x1x256xf32, #tpu.memory_space<vmem>>, vector<1x1x256xf32>
    %30 = vector.shape_cast %29 : vector<1x1x256xf32> to vector<1x256xf32>
    %31 = vector.shape_cast %28 : vector<1x256xf32> to vector<1x1x256xf32>
    tpu.vector_store %arg7[%c0_13, %c0_14, %c0_15], %31 {strides = array<i32>} : memref<1x1x256xf32, #tpu.memory_space<vmem>>, vector<1x1x256xf32>,
    %32 = vector.extract_strided_slice %27 {offsets = [1, 0], sizes = [4, 256], strides = [1, 1]} : vector<5x256xf32> to vector<4x256xf32>
    %c0_16 = arith.constant 0 : index
    %c0_17 = arith.constant 0 : index
    %c0_18 = arith.constant 0 : index
    %33 = vector.load %arg8[%c0_16, %c0_17, %c0_18] : memref<1x4x256xf32, #tpu.memory_space<vmem>>, vector<1x4x256xf32>
    %34 = vector.shape_cast %33 : vector<1x4x256xf32> to vector<4x256xf32>
    %35 = vector.shape_cast %32 : vector<4x256xf32> to vector<1x4x256xf32>
    tpu.vector_store %arg8[%c0_16, %c0_17, %c0_18], %35 {strides = array<i32>} : memref<1x4x256xf32, #tpu.memory_space<vmem>>, vector<1x4x256xf32>,
    return
  }
  func.func @transform_0(%arg0: i32, %arg1: i32) -> (i32, i32, i32) {
    %c0_i32 = arith.constant 0 : i32
    %c0_i32_0 = arith.constant 0 : i32
    return %arg0, %c0_i32, %arg1 : i32, i32, i32
  }
  func.func @transform_1(%arg0: i32, %arg1: i32) -> (i32, i32) {
    %c0_i32 = arith.constant 0 : i32
    %c0_i32_0 = arith.constant 0 : i32
    %c0_i32_1 = arith.constant 0 : i32
    return %c0_i32, %c0_i32_0 : i32, i32
  }
  func.func @transform_2(%arg0: i32, %arg1: i32) -> (i32, i32) {
    %c0_i32 = arith.constant 0 : i32
    %c0_i32_0 = arith.constant 0 : i32
    %c0_i32_1 = arith.constant 0 : i32
    return %c0_i32, %c0_i32_0 : i32, i32
  }
  func.func @transform_3(%arg0: i32, %arg1: i32) -> (i32, i32) {
    %c0_i32 = arith.constant 0 : i32
    %c0_i32_0 = arith.constant 0 : i32
    %c0_i32_1 = arith.constant 0 : i32
    return %c0_i32, %c0_i32_0 : i32, i32
  }
  func.func @transform_4(%arg0: i32, %arg1: i32) -> (i32, i32) {
    %c0_i32 = arith.constant 0 : i32
    %c0_i32_0 = arith.constant 0 : i32
    %c0_i32_1 = arith.constant 0 : i32
    return %c0_i32, %c0_i32_0 : i32, i32
  }
  func.func @transform_5(%arg0: i32, %arg1: i32) -> (i32, i32, i32) {
    %c0_i32 = arith.constant 0 : i32
    %c0_i32_0 = arith.constant 0 : i32
    return %arg0, %c0_i32, %arg1 : i32, i32, i32
  }
  func.func @transform_6(%arg0: i32, %arg1: i32) -> (i32, i32, i32) {
    %c0_i32 = arith.constant 0 : i32
    %c0_i32_0 = arith.constant 0 : i32
    return %arg0, %c0_i32, %arg1 : i32, i32, i32
  }
}

</mosaic_0001>

<llo_original>
// kernel: tpu_custom_call.1
$region0: #{tpu_custom_call.1}
  #allocation0 [shape = 'u32[]', space=smem, size = 0x4, offset = 0x4, fixed_abs, tag = 'smem constant byte address 0x4 - core index']
  #allocation1 [shape = 'u32[144,128]{1,0:T(1,128)}', space=vmem, size = 0x12000, scoped, tag = 'internal scratch']
  %s0 = inlined_call_operand.hbm [shape: f32[2,32,256], index: 0, kind: input, shape index: {}]
  %s1 = inlined_call_operand.vmem [shape: bf16[64,32], index: 1, kind: input, shape index: {}]
  %s2 = inlined_call_operand.vmem [shape: f32[64,1], index: 2, kind: input, shape index: {}]
  %s3 = inlined_call_operand.vmem [shape: bf16[5,64], index: 3, kind: input, shape index: {}]
  %s4 = inlined_call_operand.vmem [shape: f32[5,1], index: 4, kind: input, shape index: {}]
  %s5 = inlined_call_operand.hbm [shape: f32[2,1,256], index: 5, kind: output, shape index: {0}]
  %s6 = inlined_call_operand.hbm [shape: f32[2,4,256], index: 6, kind: output, shape index: {1}]
  %7 = xla_tuple %s5, %s6
  %s8 = sld [smem:[#allocation0]]
  $region65: #{tpu_custom_call.1} parent=0
    _
  %s10 = ssub.s32 1, %s8
  %s11 = scalar_select 0, %s10, %s8
  $region1: #{tpu_custom_call.1} parent=0
    #allocation2 [shape = 'u8[65536]{0}', space=vmem, size = 0x10000, scoped, tag = 'input window, operand 0']
    #allocation3 [shape = 's32[2]{0}', space=sflag, size = 0x8, scoped, tag = 'scoped memory for tpu_custom_call.1']
    #allocation4 [shape = 's32[2]{0}', space=sflag, size = 0x8, scoped, tag = 'scoped memory for tpu_custom_call.1']
    #allocation5 [shape = 'u8[2048]{0}', space=vmem, size = 0x800, scoped, tag = 'output window, operand 0']
    #allocation6 [shape = 'u8[8192]{0}', space=vmem, size = 0x2000, scoped, tag = 'output window, operand 1']
    #allocation7 [shape = 's32[2]{0}', space=sflag, size = 0x8, scoped, tag = 'scoped memory for tpu_custom_call.1']
    %12 = vsyncpa [#allocation3], 0
    %s13 = scalar_lea.sflag [#allocation3], 1
    %14 = vsyncpa %s13, 0
    %15 = vsyncpa [#allocation4], 0
    %s16 = scalar_lea.sflag [#allocation4], 1
    %17 = vsyncpa %s16, 0
    %18 = vsyncpa [#allocation7], 0
    %s19 = scalar_lea.sflag [#allocation7], 1
    %20 = vsyncpa %s19, 0
    loop: start=0, step=1, limit=4
    $region2: #{tpu_custom_call.1} parent=1 // loop_pre_header
      _
    $region3: #{tpu_custom_call.1} parent=1 // loop_header
      %s22 = sphi 0, %s26
      %p23 = scmp.ge.s32.totalorder %s22, 4
      %s29 = sphi 0, %s41
      %s30 = sphi 0, %s37
      %s31 = sphi 0, %s29
      %s32 = sphi 0, %s30
      %s33 = sphi 0, %s31
      %s34 = sphi 0, %s32
      %s46 = sphi 0, %s48
      %s49 = sphi 0, %s46
      %s50 = sphi 0, %s49
      %s66 = sphi 0, %s50
      %s70 = sphi 0, %s70
      %s72 = sphi 0, %s70
      %s73 = sphi 0, %s72
      %s87 = sphi 0, %s73
      %s91 = sphi 0, %s91
      %s93 = sphi 0, %s91
      %s94 = sphi 0, %s93
      %s108 = sphi 0, %s94
      %s112 = sphi 0, %s112
      %s114 = sphi 0, %s112
      %s115 = sphi 0, %s114
      %s129 = sphi 0, %s115
      %s133 = sphi 0, %s133
      %s135 = sphi 0, %s133
      %s136 = sphi 0, %s135
      %s150 = sphi 0, %s136
      %s158 = sphi 0, %s160
      %s161 = sphi 0, %s158
      %s162 = sphi 0, %s161
      %s178 = sphi 0, %s162
      %s186 = sphi 0, %s188
      %s189 = sphi 0, %s186
      %s190 = sphi 0, %s189
      %s206 = sphi 0, %s190
    $region4: #{tpu_custom_call.1} parent=1 // loop_header_branch
      %25 = sbr.rel (%p23) target = $region8
    $region5: #{tpu_custom_call.1} parent=1 // loop_body
      %s27 = ssub.s32 %s22, 1
      %s28 = ssub.s32 %s22, 2
      %s35 = sadd.s32 1, %s30
      %p36 = scmp.ge.s32.totalorder %s35, 1
      %s37 = scalar_select %p36, 0, %s35
      %s38 = sadd.s32 1, %s29
      %s39 = scalar_select %p36, %s38, %s29
      %p40 = scmp.ge.s32.totalorder %s39, 2
      %s41 = scalar_select %p40, 0, %s39
      %s42 = ssub.s32 %s29, %s41
      %s43 = ssub.s32 %s30, %s37
      %s44 = sor.u32 %s42, %s43
      %p45 = scmp.eq.s32.totalorder %s44, 0
      %s47 = sadd.s32 %s46, 1
      %s48 = scalar_select %p45, %s46, %s47
      %p51 = pneg %p45
      %p52 = scmp.eq.s32.totalorder %s22, 1
      %p53 = por %p51, %p52
      %p54 = scmp.ne.s32.totalorder %s46, %s49
      %p55 = scmp.eq.s32.totalorder %s22, 0
      %p56 = por %p54, %p55
      %p57 = scmp.ne.s32.totalorder %s46, %s49
      %p58 = scmp.eq.s32.totalorder %s27, 1
      %p59 = por %p57, %p58
      %p60 = scmp.ne.s32.totalorder %s49, %s50
      %p61 = scmp.eq.s32.totalorder %s27, 0
      %p62 = por %p60, %p61
      %p63 = scmp.ne.s32.totalorder %s49, %s50
      %p64 = scmp.eq.s32.totalorder %s28, 1
      %p65 = por %p63, %p64
      %p67 = scmp.ne.s32.totalorder %s50, %s66
      %p68 = scmp.eq.s32.totalorder %s28, 0
      %p69 = por %p67, %p68
      %s71 = sadd.s32 %s70, 1
      %p74 = scmp.eq.s32.totalorder %s22, 1
      %p75 = scmp.ne.s32.totalorder %s70, %s72
      %p76 = scmp.eq.s32.totalorder %s22, 0
      %p77 = por %p75, %p76
      %p78 = scmp.ne.s32.totalorder %s70, %s72
      %p79 = scmp.eq.s32.totalorder %s27, 1
      %p80 = por %p78, %p79
      %p81 = scmp.ne.s32.totalorder %s72, %s73
      %p82 = scmp.eq.s32.totalorder %s27, 0
      %p83 = por %p81, %p82
      %p84 = scmp.ne.s32.totalorder %s72, %s73
      %p85 = scmp.eq.s32.totalorder %s28, 1
      %p86 = por %p84, %p85
      %p88 = scmp.ne.s32.totalorder %s73, %s87
      %p89 = scmp.eq.s32.totalorder %s28, 0
      %p90 = por %p88, %p89
      %s92 = sadd.s32 %s91, 1
      %p95 = scmp.eq.s32.totalorder %s22, 1
      %p96 = scmp.ne.s32.totalorder %s91, %s93
      %p97 = scmp.eq.s32.totalorder %s22, 0
      %p98 = por %p96, %p97
      %p99 = scmp.ne.s32.totalorder %s91, %s93
      %p100 = scmp.eq.s32.totalorder %s27, 1
      %p101 = por %p99, %p100
      %p102 = scmp.ne.s32.totalorder %s93, %s94
      %p103 = scmp.eq.s32.totalorder %s27, 0
      %p104 = por %p102, %p103
      %p105 = scmp.ne.s32.totalorder %s93, %s94
      %p106 = scmp.eq.s32.totalorder %s28, 1
      %p107 = por %p105, %p106
      %p109 = scmp.ne.s32.totalorder %s94, %s108
      %p110 = scmp.eq.s32.totalorder %s28, 0
      %p111 = por %p109, %p110
      %s113 = sadd.s32 %s112, 1
      %p116 = scmp.eq.s32.totalorder %s22, 1
      %p117 = scmp.ne.s32.totalorder %s112, %s114
      %p118 = scmp.eq.s32.totalorder %s22, 0
      %p119 = por %p117, %p118
      %p120 = scmp.ne.s32.totalorder %s112, %s114
      %p121 = scmp.eq.s32.totalorder %s27, 1
      %p122 = por %p120, %p121
      %p123 = scmp.ne.s32.totalorder %s114, %s115
      %p124 = scmp.eq.s32.totalorder %s27, 0
      %p125 = por %p123, %p124
      %p126 = scmp.ne.s32.totalorder %s114, %s115
      %p127 = scmp.eq.s32.totalorder %s28, 1
      %p128 = por %p126, %p127
      %p130 = scmp.ne.s32.totalorder %s115, %s129
      %p131 = scmp.eq.s32.totalorder %s28, 0
      %p132 = por %p130, %p131
      %s134 = sadd.s32 %s133, 1
      %p137 = scmp.eq.s32.totalorder %s22, 1
      %p138 = scmp.ne.s32.totalorder %s133, %s135
      %p139 = scmp.eq.s32.totalorder %s22, 0
      %p140 = por %p138, %p139
      %p141 = scmp.ne.s32.totalorder %s133, %s135
      %p142 = scmp.eq.s32.totalorder %s27, 1
      %p143 = por %p141, %p142
      %p144 = scmp.ne.s32.totalorder %s135, %s136
      %p145 = scmp.eq.s32.totalorder %s27, 0
      %p146 = por %p144, %p145
      %p147 = scmp.ne.s32.totalorder %s135, %s136
      %p148 = scmp.eq.s32.totalorder %s28, 1
      %p149 = por %p147, %p148
      %p151 = scmp.ne.s32.totalorder %s136, %s150
      %p152 = scmp.eq.s32.totalorder %s28, 0
      %p153 = por %p151, %p152
      %s154 = ssub.s32 %s29, %s41
      %s155 = ssub.s32 %s30, %s37
      %s156 = sor.u32 %s154, %s155
      %p157 = scmp.eq.s32.totalorder %s156, 0
      %s159 = sadd.s32 %s158, 1
      %s160 = scalar_select %p157, %s158, %s159
      %p163 = pneg %p157
      %p164 = scmp.eq.s32.totalorder %s22, 1
      %p165 = por %p163, %p164
      %p166 = scmp.ne.s32.totalorder %s158, %s161
      %p167 = scmp.eq.s32.totalorder %s22, 0
      %p168 = por %p166, %p167
      %p169 = scmp.ne.s32.totalorder %s158, %s161
      %p170 = scmp.eq.s32.totalorder %s27, 1
      %p171 = por %p169, %p170
      %p172 = scmp.ne.s32.totalorder %s161, %s162
      %p173 = scmp.eq.s32.totalorder %s27, 0
      %p174 = por %p172, %p173
      %p175 = scmp.ne.s32.totalorder %s161, %s162
      %p176 = scmp.eq.s32.totalorder %s28, 1
      %p177 = por %p175, %p176
      %p179 = scmp.ne.s32.totalorder %s162, %s178
      %p180 = scmp.eq.s32.totalorder %s28, 0
      %p181 = por %p179, %p180
      %s182 = ssub.s32 %s29, %s41
      %s183 = ssub.s32 %s30, %s37
      %s184 = sor.u32 %s182, %s183
      %p185 = scmp.eq.s32.totalorder %s184, 0
      %s187 = sadd.s32 %s186, 1
      %s188 = scalar_select %p185, %s186, %s187
      %p191 = pneg %p185
      %p192 = scmp.eq.s32.totalorder %s22, 1
      %p193 = por %p191, %p192
      %p194 = scmp.ne.s32.totalorder %s186, %s189
      %p195 = scmp.eq.s32.totalorder %s22, 0
      %p196 = por %p194, %p195
      %p197 = scmp.ne.s32.totalorder %s186, %s189
      %p198 = scmp.eq.s32.totalorder %s27, 1
      %p199 = por %p197, %p198
      %p200 = scmp.ne.s32.totalorder %s189, %s190
      %p201 = scmp.eq.s32.totalorder %s27, 0
      %p202 = por %p200, %p201
      %p203 = scmp.ne.s32.totalorder %s189, %s190
      %p204 = scmp.eq.s32.totalorder %s28, 1
      %p205 = por %p203, %p204
      %p207 = scmp.ne.s32.totalorder %s190, %s206
      %p208 = scmp.eq.s32.totalorder %s28, 0
      %p209 = por %p207, %p208
      %p210 = scmp.le.s32.totalorder 1, %s22
      %p211 = scmp.lt.s32.totalorder %s22, 3
      %p212 = pnand %p210, %p211
      %p213 = pneg %p212
      // Predicated region
      $region9: #{tpu_custom_call.1} parent=5 // pred_check
        _
      $region10: #{tpu_custom_call.1} parent=5 // pred_check_branch
        %215 = sbr.rel (%p212) target = $region12
      $region11: #{tpu_custom_call.1} parent=5 // pred_region
        %s216 = ssub.s32 %s22, 1
        // Predicated region
        $region13: #{tpu_custom_call.1} parent=11 // pred_check
          %p217 = pneg %p83
        $region14: #{tpu_custom_call.1} parent=11 // pred_check_branch
          %219 = sbr.rel (%p217) target = $region16
        $region15: #{tpu_custom_call.1} parent=11 // pred_region
          _
        $region16: #{tpu_custom_call.1} parent=11 // pred_fallthru
          _
        // Predicated region
        $region17: #{tpu_custom_call.1} parent=11 // pred_check
          %p220 = pneg %p104
        $region18: #{tpu_custom_call.1} parent=11 // pred_check_branch
          %222 = sbr.rel (%p220) target = $region20
        $region19: #{tpu_custom_call.1} parent=11 // pred_region
          _
        $region20: #{tpu_custom_call.1} parent=11 // pred_fallthru
          _
        // Predicated region
        $region21: #{tpu_custom_call.1} parent=11 // pred_check
          %p223 = pneg %p125
        $region22: #{tpu_custom_call.1} parent=11 // pred_check_branch
          %225 = sbr.rel (%p223) target = $region24
        $region23: #{tpu_custom_call.1} parent=11 // pred_region
          _
        $region24: #{tpu_custom_call.1} parent=11 // pred_fallthru
          _
        // Predicated region
        $region25: #{tpu_custom_call.1} parent=11 // pred_check
          %p226 = pneg %p146
        $region26: #{tpu_custom_call.1} parent=11 // pred_check_branch
          %228 = sbr.rel (%p226) target = $region28
        $region27: #{tpu_custom_call.1} parent=11 // pred_region
          _
        $region28: #{tpu_custom_call.1} parent=11 // pred_fallthru
          _
      $region12: #{tpu_custom_call.1} parent=5 // pred_fallthru
        _
      %p229 = scmp.lt.s32.totalorder %s22, 2
      // Predicated region
      $region29: #{tpu_custom_call.1} parent=5 // pred_check
        %p230 = pneg %p229
      $region30: #{tpu_custom_call.1} parent=5 // pred_check_branch
        %232 = sbr.rel (%p230) target = $region32
      $region31: #{tpu_custom_call.1} parent=5 // pred_region
        // Predicated region
        $region33: #{tpu_custom_call.1} parent=31 // pred_check
          %p233 = pneg %p56
        $region34: #{tpu_custom_call.1} parent=31 // pred_check_branch
          %235 = sbr.rel (%p233) target = $region36
        $region35: #{tpu_custom_call.1} parent=31 // pred_region
          %s236 = sand.u32 %s46, 1
          %s237 = scalar_lea.sflag [#allocation3], %s236
          %s238 = sand.u32 %s46, 1
          %s239 = smul.addr %s238, 64
          %s240 = scalar_lea.vmem [#allocation2], %s239
          %s241 = smul.u32 2, %s30
          %s243 = ssub.s32 1024, 1024
          %244 = vsyncadd %s237, %s243
          %s245 = smul.addr %s29, 8
          %s246 = sadd.s32 %s241, %s245
          %s247 = smul.addr %s246, 128
          %s248 = scalar_lea.hbm %s0, %s247
          %s249 = sshll.u32 %s240, 4
          %s250 = int_to_ptr.vmem [resolvable:$true] %s249
          %255 = dma.hbm_to_vmem [thread:$0]  %s248, 1024, %s250, %s237, 256, 256, 16
        $region36: #{tpu_custom_call.1} parent=31 // pred_fallthru
          _
      $region32: #{tpu_custom_call.1} parent=5 // pred_fallthru
        _
      %p256 = scmp.le.s32.totalorder 1, %s22
      %p257 = scmp.lt.s32.totalorder %s22, 3
      %p258 = pnand %p256, %p257
      %p259 = pneg %p258
      // Predicated region
      $region37: #{tpu_custom_call.1} parent=5 // pred_check
        _
      $region38: #{tpu_custom_call.1} parent=5 // pred_check_branch
        %261 = sbr.rel (%p258) target = $region40
      $region39: #{tpu_custom_call.1} parent=5 // pred_region
        %s262 = ssub.s32 %s22, 1
        %s263 = sand.u32 %s49, 1
        %s264 = scalar_lea.sflag [#allocation3], %s263
        %s265 = sand.u32 %s49, 1
        %s266 = smul.addr %s265, 64
        %s267 = scalar_lea.vmem [#allocation2], %s266
        // Predicated region
        $region41: #{tpu_custom_call.1} parent=39 // pred_check
          %p268 = pneg %p62
        $region42: #{tpu_custom_call.1} parent=39 // pred_check_branch
          %270 = sbr.rel (%p268) target = $region44
        $region43: #{tpu_custom_call.1} parent=39 // pred_region
          %271 = dma.done %s264, 1024
        $region44: #{tpu_custom_call.1} parent=39 // pred_fallthru
          _
        %s272 = sand.u32 %s49, 1
        %s273 = scalar_lea.sflag [#allocation3], %s272
        %s274 = sand.u32 %s49, 1
        %s275 = smul.addr %s274, 64
        %s276 = scalar_lea.vmem [#allocation2], %s275
        %p277 = pneg %p62
        %p278 = pneg %p59
        %p279 = pneg %p83
        %p280 = pneg %p80
        %p281 = pneg %p104
        %p282 = pneg %p101
        %p283 = pneg %p125
        %p284 = pneg %p122
        %p285 = pneg %p146
        %p286 = pneg %p143
        %p287 = pneg %p174
        %p288 = pneg %p171
        %s289 = sand.u32 %s161, 1
        %s290 = scalar_lea.sflag [#allocation4], %s289
        %s291 = sand.u32 %s161, 1
        %s292 = smul.addr %s291, 2
        %s293 = scalar_lea.vmem [#allocation5], %s292
        %p294 = pneg %p202
        %p295 = pneg %p199
        %s296 = sand.u32 %s189, 1
        %s297 = scalar_lea.sflag [#allocation7], %s296
        %s298 = sand.u32 %s189, 1
        %s299 = smul.addr %s298, 8
        %s300 = scalar_lea.vmem [#allocation6], %s299
        %s301 = smul.u32 2, %s32
        %s302 = smul.u32 2, %s32
        %s303 = smul.u32 2, %s32
        %v305 = vld [vmem:[%s267] sm:$0xff]
        %v306 = vld [vmem:[%s267 + $0x8] sm:$0xff]
        %v307 = vld [vmem:[%s267 + $0x10] sm:$0xff]
        %v308 = vld [vmem:[%s267 + $0x18] sm:$0xff]
        %v309 = vld [vmem:[%s267 + $0x20] sm:$0xff]
        %v310 = vld [vmem:[%s267 + $0x28] sm:$0xff]
        %v311 = vld [vmem:[%s267 + $0x30] sm:$0xff]
        %v312 = vld [vmem:[%s267 + $0x38] sm:$0xff]
        %v313 = vpack.c.bf16 %v307, %v305
        %v314 = vpack.c.bf16 %v308, %v306
        %v315 = vpack.c.bf16 %v311, %v309
        %v316 = vpack.c.bf16 %v312, %v310
        %v317 = vld [vmem:[%s1] sm:$0xf]
        %v318 = vld [vmem:[%s1 + $0x4] sm:$0xf]
        %v319 = vld [vmem:[%s1 + $0x8] sm:$0xf]
        %v320 = vld [vmem:[%s1 + $0xc] sm:$0xf]
        %v321 = vld [vmem:[%s1 + $0x10] sm:$0xf]
        %v322 = vld [vmem:[%s1 + $0x14] sm:$0xf]
        %v323 = vld [vmem:[%s1 + $0x18] sm:$0xf]
        %v324 = vld [vmem:[%s1 + $0x1c] sm:$0xf]
        %v325 = vld [vmem:[%s2] sm:$0xff]
        %v326 = vld [vmem:[%s2 + $0x8] sm:$0xff]
        %v327 = vld [vmem:[%s2 + $0x10] sm:$0xff]
        %v328 = vld [vmem:[%s2 + $0x18] sm:$0xff]
        %v329 = vld [vmem:[%s2 + $0x20] sm:$0xff]
        %v330 = vld [vmem:[%s2 + $0x28] sm:$0xff]
        %v331 = vld [vmem:[%s2 + $0x30] sm:$0xff]
        %v332 = vld [vmem:[%s2 + $0x38] sm:$0xff]
        %334 = vset.pattern.permute.xlu0 0
        %335 = vperm.xlu0 %334, %v325
        %v336 = vpop.permute.xlu0 %335
        %339 = vset.pattern.permute.xlu0 0
        %340 = vperm.xlu0 %339, %v326
        %v341 = vpop.permute.xlu0 %340
        %344 = vset.pattern.permute.xlu0 0
        %345 = vperm.xlu0 %344, %v327
        %v346 = vpop.permute.xlu0 %345
        %349 = vset.pattern.permute.xlu0 0
        %350 = vperm.xlu0 %349, %v328
        %v351 = vpop.permute.xlu0 %350
        %354 = vset.pattern.permute.xlu0 0
        %355 = vperm.xlu0 %354, %v329
        %v356 = vpop.permute.xlu0 %355
        %359 = vset.pattern.permute.xlu0 0
        %360 = vperm.xlu0 %359, %v330
        %v361 = vpop.permute.xlu0 %360
        %364 = vset.pattern.permute.xlu0 0
        %365 = vperm.xlu0 %364, %v331
        %v366 = vpop.permute.xlu0 %365
        %369 = vset.pattern.permute.xlu0 0
        %370 = vperm.xlu0 %369, %v332
        %v371 = vpop.permute.xlu0 %370
        %v381 = vunpack.c.l.b16 %v317
        %v382 = vunpack.c.l.b16 %v318
        %v383 = vunpack.c.l.b16 %v319
        %v384 = vunpack.c.l.b16 %v320
        %v385 = vunpack.c.l.b16 %v321
        %v386 = vunpack.c.l.b16 %v322
        %v387 = vunpack.c.l.b16 %v323
        %v388 = vunpack.c.l.b16 %v324
        %v389 = vpack.c.b16 %v382, %v381
        %v390 = vpack.c.b16 %v384, %v383
        %v391 = vpack.c.b16 %v386, %v385
        %v392 = vpack.c.b16 %v388, %v387
        %vm393 = vcmask 261120
        %v395 = vsel %vm393, %v389, 0
        %v398 = vsel %vm393, %v390, 0
        %v401 = vsel %vm393, %v391, 0
        %v404 = vsel %vm393, %v392, 0
        %406 = vmatprep.subr.bf16.mxu0 %v314
        %407 = vmatpush1.bf16.msra.mxu0 %v313
        %408 = vmatprep.subr.bf16.mxu0 %v316
        %409 = vmatpush1.bf16.msra.mxu0 %v315
        %410 = vmatprep.subr.bf16.mxu0 0
        %411 = vmatpush1.bf16.msra.mxu0 0
        %412 = vmatprep.subr.bf16.mxu0 0
        %413 = vmatpush1.bf16.msra.mxu0 0
        %414 = vmatprep.subr.bf16.mxu0 0
        %415 = vmatpush1.bf16.msra.mxu0 0
        %416 = vmatprep.subr.bf16.mxu0 0
        %417 = vmatpush1.bf16.msra.mxu0 0
        %418 = vmatprep.subr.bf16.mxu0 0
        %419 = vmatpush1.bf16.msra.mxu0 0
        %420 = vmatprep.subr.bf16.mxu0 0
        %421 = vmatpush1.bf16.msra.mxu0 0
        %422 = vmatprep.subr.bf16.mxu0 0
        %423 = vmatpush1.bf16.msra.mxu0 0
        %424 = vmatprep.subr.bf16.mxu0 0
        %425 = vmatpush1.bf16.msra.mxu0 0
        %426 = vmatprep.subr.bf16.mxu0 0
        %427 = vmatpush1.bf16.msra.mxu0 0
        %428 = vmatprep.subr.bf16.mxu0 0
        %429 = vmatpush1.bf16.msra.mxu0 0
        %430 = vmatprep.subr.bf16.mxu0 0
        %431 = vmatpush1.bf16.msra.mxu0 0
        %432 = vmatprep.subr.bf16.mxu0 0
        %433 = vmatpush1.bf16.msra.mxu0 0
        %434 = vmatprep.subr.bf16.mxu0 0
        %435 = vmatpush1.bf16.msra.mxu0 0
        %436 = vmatprep.subr.bf16.mxu0 0
        %437 = vmatpush1.bf16.msra.mxu0 0
        %438 = vmatprep.mubr.bf16.mxu0 0
        %439 = vmatmul.mubr.bf16.gmra.mrb[0].mxu0 %v395
        %v440 = vpop.f32.mrb[0].mxu0
        %v441 = vadd.f32 %v336, %v440
        %v442 = vpop.f32.mrb[0].mxu0
        %v443 = vadd.f32 %v336, %v442
        %v444 = vpop.f32.mrb[0].mxu0
        %v445 = vadd.f32 %v341, %v444
        %v446 = vpop.f32.mrb[0].mxu0
        %v447 = vadd.f32 %v341, %v446
        %448 = vmatprep.mubr.bf16.mxu0 0
        %449 = vmatmul.mubr.bf16.gmra.mrb[0].mxu0 %v398
        %v450 = vpop.f32.mrb[0].mxu0
        %v451 = vadd.f32 %v346, %v450
        %v452 = vpop.f32.mrb[0].mxu0
        %v453 = vadd.f32 %v346, %v452
        %v454 = vpop.f32.mrb[0].mxu0
        %v455 = vadd.f32 %v351, %v454
        %v456 = vpop.f32.mrb[0].mxu0
        %v457 = vadd.f32 %v351, %v456
        %458 = vmatprep.mubr.bf16.mxu0 0
        %459 = vmatmul.mubr.bf16.gmra.mrb[0].mxu0 %v401
        %v460 = vpop.f32.mrb[0].mxu0
        %v461 = vadd.f32 %v356, %v460
        %v462 = vpop.f32.mrb[0].mxu0
        %v463 = vadd.f32 %v356, %v462
        %v464 = vpop.f32.mrb[0].mxu0
        %v465 = vadd.f32 %v361, %v464
        %v466 = vpop.f32.mrb[0].mxu0
        %v467 = vadd.f32 %v361, %v466
        %468 = vmatprep.mubr.bf16.mxu0 0
        %469 = vmatmul.mubr.bf16.gmra.mrb[0].mxu0 %v404
        %v470 = vpop.f32.mrb[0].mxu0
        %v471 = vadd.f32 %v366, %v470
        %v472 = vpop.f32.mrb[0].mxu0
        %v473 = vadd.f32 %v366, %v472
        %v474 = vpop.f32.mrb[0].mxu0
        %v475 = vadd.f32 %v371, %v474
        %v476 = vpop.f32.mrb[0].mxu0
        %v477 = vadd.f32 %v371, %v476
        %478 = vdwg.mxu0
        %v479 = vlaneseq
        %v480 = vshrl.u32 %v479, 7
        %v481 = vadd.s32 %v480, 8
        %v482 = vadd.s32 %v480, 16
        %v483 = vadd.s32 %v480, 24
        %v484 = vadd.s32 %v480, 32
        %v485 = vadd.s32 %v480, 40
        %v486 = vadd.s32 %v480, 48
        %v487 = vadd.s32 %v480, 56
        %vm488 = vcmp.lt.s32.totalorder %v480, 32
        %vm489 = vcmp.lt.s32.totalorder %v481, 32
        %vm490 = vcmp.lt.s32.totalorder %v482, 32
        %vm491 = vcmp.lt.s32.totalorder %v483, 32
        %vm492 = vcmp.lt.s32.totalorder %v484, 32
        %vm493 = vcmp.lt.s32.totalorder %v485, 32
        %vm494 = vcmp.lt.s32.totalorder %v486, 32
        %vm495 = vcmp.lt.s32.totalorder %v487, 32
        %v496 = vxor.u32 %v441, 2147483648
        %v497 = vxor.u32 %v443, 2147483648
        %v498 = vxor.u32 %v445, 2147483648
        %v499 = vxor.u32 %v447, 2147483648
        %v500 = vxor.u32 %v451, 2147483648
        %v501 = vxor.u32 %v453, 2147483648
        %v502 = vxor.u32 %v455, 2147483648
        %v503 = vxor.u32 %v457, 2147483648
        %v504 = vxor.u32 %v461, 2147483648
        %v505 = vxor.u32 %v463, 2147483648
        %v506 = vxor.u32 %v465, 2147483648
        %v507 = vxor.u32 %v467, 2147483648
        %v508 = vxor.u32 %v471, 2147483648
        %v509 = vxor.u32 %v473, 2147483648
        %v510 = vxor.u32 %v475, 2147483648
        %v511 = vxor.u32 %v477, 2147483648
        %v512 = vmul.f32 %v496, 1.442695
        %v513 = vpow.pop %v512
        %v514 = vmul.f32 %v497, 1.442695
        %v515 = vpow.pop %v514
        %v516 = vmul.f32 %v498, 1.442695
        %v517 = vpow.pop %v516
        %v518 = vmul.f32 %v499, 1.442695
        %v519 = vpow.pop %v518
        %v520 = vmul.f32 %v500, 1.442695
        %v521 = vpow.pop %v520
        %v522 = vmul.f32 %v501, 1.442695
        %v523 = vpow.pop %v522
        %v524 = vmul.f32 %v502, 1.442695
        %v525 = vpow.pop %v524
        %v526 = vmul.f32 %v503, 1.442695
        %v527 = vpow.pop %v526
        %v528 = vmul.f32 %v504, 1.442695
        %v529 = vpow.pop %v528
        %v530 = vmul.f32 %v505, 1.442695
        %v531 = vpow.pop %v530
        %v532 = vmul.f32 %v506, 1.442695
        %v533 = vpow.pop %v532
        %v534 = vmul.f32 %v507, 1.442695
        %v535 = vpow.pop %v534
        %v536 = vmul.f32 %v508, 1.442695
        %v537 = vpow.pop %v536
        %v538 = vmul.f32 %v509, 1.442695
        %v539 = vpow.pop %v538
        %v540 = vmul.f32 %v510, 1.442695
        %v541 = vpow.pop %v540
        %v542 = vmul.f32 %v511, 1.442695
        %v543 = vpow.pop %v542
        %v544 = vadd.f32 %v513, 1.0
        %v545 = vadd.f32 %v515, 1.0
        %v546 = vadd.f32 %v517, 1.0
        %v547 = vadd.f32 %v519, 1.0
        %v548 = vadd.f32 %v521, 1.0
        %v549 = vadd.f32 %v523, 1.0
        %v550 = vadd.f32 %v525, 1.0
        %v551 = vadd.f32 %v527, 1.0
        %v552 = vadd.f32 %v529, 1.0
        %v553 = vadd.f32 %v531, 1.0
        %v554 = vadd.f32 %v533, 1.0
        %v555 = vadd.f32 %v535, 1.0
        %v556 = vadd.f32 %v537, 1.0
        %v557 = vadd.f32 %v539, 1.0
        %v558 = vadd.f32 %v541, 1.0
        %v559 = vadd.f32 %v543, 1.0
        %v560 = vrcp.pop %v544
        %v561 = vmul.f32 1.0, %v560
        %v562 = vrcp.pop %v545
        %v563 = vmul.f32 1.0, %v562
        %v564 = vrcp.pop %v546
        %v565 = vmul.f32 1.0, %v564
        %v566 = vrcp.pop %v547
        %v567 = vmul.f32 1.0, %v566
        %v568 = vrcp.pop %v548
        %v569 = vmul.f32 1.0, %v568
        %v570 = vrcp.pop %v549
        %v571 = vmul.f32 1.0, %v570
        %v572 = vrcp.pop %v550
        %v573 = vmul.f32 1.0, %v572
        %v574 = vrcp.pop %v551
        %v575 = vmul.f32 1.0, %v574
        %v576 = vrcp.pop %v552
        %v577 = vmul.f32 1.0, %v576
        %v578 = vrcp.pop %v553
        %v579 = vmul.f32 1.0, %v578
        %v580 = vrcp.pop %v554
        %v581 = vmul.f32 1.0, %v580
        %v582 = vrcp.pop %v555
        %v583 = vmul.f32 1.0, %v582
        %v584 = vrcp.pop %v556
        %v585 = vmul.f32 1.0, %v584
        %v586 = vrcp.pop %v557
        %v587 = vmul.f32 1.0, %v586
        %v588 = vrcp.pop %v558
        %v589 = vmul.f32 1.0, %v588
        %v590 = vrcp.pop %v559
        %v591 = vmul.f32 1.0, %v590
        %v592 = vsel %vm488, %v441, %v561
        %v593 = vsel %vm488, %v443, %v563
        %v594 = vsel %vm489, %v445, %v565
        %v595 = vsel %vm489, %v447, %v567
        %v596 = vsel %vm490, %v451, %v569
        %v597 = vsel %vm490, %v453, %v571
        %v598 = vsel %vm491, %v455, %v573
        %v599 = vsel %vm491, %v457, %v575
        %v600 = vsel %vm492, %v461, %v577
        %v601 = vsel %vm492, %v463, %v579
        %v602 = vsel %vm493, %v465, %v581
        %v603 = vsel %vm493, %v467, %v583
        %v604 = vsel %vm494, %v471, %v585
        %v605 = vsel %vm494, %v473, %v587
        %v606 = vsel %vm495, %v475, %v589
        %v607 = vsel %vm495, %v477, %v591
        %v608 = vld [vmem:[%s3] sm:$0x7]
        %v609 = vpack.c.bf16 %v594, %v592
        %v610 = vpack.c.bf16 %v595, %v593
        %v611 = vpack.c.bf16 %v598, %v596
        %v612 = vpack.c.bf16 %v599, %v597
        %v613 = vpack.c.bf16 %v602, %v600
        %v614 = vpack.c.bf16 %v603, %v601
        %v615 = vpack.c.bf16 %v606, %v604
        %v616 = vpack.c.bf16 %v607, %v605
        %v617 = vld [vmem:[%s4] sm:$0x1f]
        %619 = vset.pattern.permute.xlu0 0
        %620 = vperm.xlu0 %619, %v617
        %v621 = vpop.permute.xlu0 %620
        %vm623 = vcmask 523264
        %v625 = vsel %vm623, %v608, 0
        %627 = vmatprep.subr.bf16.mxu0 %v610
        %628 = vmatpush1.bf16.msra.mxu0 %v609
        %629 = vmatprep.subr.bf16.mxu0 %v612
        %630 = vmatpush1.bf16.msra.mxu0 %v611
        %631 = vmatprep.subr.bf16.mxu0 %v614
        %632 = vmatpush1.bf16.msra.mxu0 %v613
        %633 = vmatprep.subr.bf16.mxu0 %v616
        %634 = vmatpush1.bf16.msra.mxu0 %v615
        %635 = vmatprep.subr.bf16.mxu0 0
        %636 = vmatpush1.bf16.msra.mxu0 0
        %637 = vmatprep.subr.bf16.mxu0 0
        %638 = vmatpush1.bf16.msra.mxu0 0
        %639 = vmatprep.subr.bf16.mxu0 0
        %640 = vmatpush1.bf16.msra.mxu0 0
        %641 = vmatprep.subr.bf16.mxu0 0
        %642 = vmatpush1.bf16.msra.mxu0 0
        %643 = vmatprep.subr.bf16.mxu0 0
        %644 = vmatpush1.bf16.msra.mxu0 0
        %645 = vmatprep.subr.bf16.mxu0 0
        %646 = vmatpush1.bf16.msra.mxu0 0
        %647 = vmatprep.subr.bf16.mxu0 0
        %648 = vmatpush1.bf16.msra.mxu0 0
        %649 = vmatprep.subr.bf16.mxu0 0
        %650 = vmatpush1.bf16.msra.mxu0 0
        %651 = vmatprep.subr.bf16.mxu0 0
        %652 = vmatpush1.bf16.msra.mxu0 0
        %653 = vmatprep.subr.bf16.mxu0 0
        %654 = vmatpush1.bf16.msra.mxu0 0
        %655 = vmatprep.subr.bf16.mxu0 0
        %656 = vmatpush1.bf16.msra.mxu0 0
        %657 = vmatprep.subr.bf16.mxu0 0
        %658 = vmatpush1.bf16.msra.mxu0 0
        %659 = vmatprep.mubr.bf16.mxu0 0
        %660 = vmatmul.mubr.bf16.gmra.mrb[0].mxu0 %v625
        %v661 = vpop.f32.mrb[0].mxu0
        %v662 = vadd.f32 %v621, %v661
        %v663 = vpop.f32.mrb[0].mxu0
        %v664 = vadd.f32 %v621, %v663
        %v665 = vpop.f32.mrb[0].mxu0
        %v666 = vpop.f32.mrb[0].mxu0
        %667 = vdwg.mxu0
        %v668 = vxor.u32 %v662, 2147483648
        %v669 = vxor.u32 %v664, 2147483648
        %v670 = vmul.f32 %v668, 1.442695
        %v671 = vpow.pop %v670
        %v672 = vmul.f32 %v669, 1.442695
        %v673 = vpow.pop %v672
        %v674 = vadd.f32 %v671, 1.0
        %v675 = vadd.f32 %v673, 1.0
        %v676 = vrcp.pop %v674
        %v677 = vmul.f32 1.0, %v676
        %v678 = vrcp.pop %v675
        %v679 = vmul.f32 1.0, %v678
        %v682 = vcombine.low %v677, %v679
        %v684 = vunpack.c.l.s4 1966171168
        %v685 = vunpack.c.0.s8 %v684
        %v686 = vlaneseq
        %v687 = vshrl.u32 %v686, 7
        %v688 = vsub.s32 %v685, %v687
        %v689 = vrot.slane %v682, %v688
        %v691 = vunpack.c.l.s4 1966171168
        %v692 = vunpack.c.0.s8 %v691
        %v693 = vlaneseq
        %v694 = vshrl.u32 %v693, 7
        %v695 = vsub.s32 %v692, %v694
        %v696 = vrot.slane %v689, %v695
        %v698 = vlaneseq
        %vm699 = vcmp.ge.s32.totalorder %v698, 0
        %vm700 = vcmp.lt.s32.totalorder %v698, 256
        %vm701 = vmand %vm699, %vm700
        %702 = vst.msk [vmem:[%s293] sm:$0x3] %vm701, %v696
        %v703 = vcombine.high %v677, %v679
        %vm704 = vcmask 1042432
        %vm705 = vcmask 1046532
        %vm706 = vmor %vm704, %vm705
        %v707 = vrot.slane %v682, 5
        %v708 = vrot.slane %v707, 4
        %v709 = vrot.slane %v703, 5
        %v710 = vsel %vm706, %v708, %v709
        %712 = vst [vmem:[%s300] sm:$0xff] %v710
        %s713 = sand.u32 %s161, 1
        %s714 = scalar_lea.sflag [#allocation4], %s713
        %s715 = sand.u32 %s161, 1
        %s716 = smul.addr %s715, 2
        %s717 = scalar_lea.vmem [#allocation5], %s716
        %s718 = sand.u32 %s189, 1
        %s719 = scalar_lea.sflag [#allocation7], %s718
        %s720 = sand.u32 %s189, 1
        %s721 = smul.addr %s720, 8
        %s722 = scalar_lea.vmem [#allocation6], %s721
        // Predicated region
        $region45: #{tpu_custom_call.1} parent=39 // pred_check
          %p723 = pneg %p171
        $region46: #{tpu_custom_call.1} parent=39 // pred_check_branch
          %725 = sbr.rel (%p723) target = $region48
        $region47: #{tpu_custom_call.1} parent=39 // pred_region
          %s726 = smul.u32 2, %s32
          %s728 = ssub.s32 32, 32
          %729 = vsyncadd %s714, %s728
          %s730 = smul.addr %s31, 2
          %s731 = sadd.s32 %s726, %s730
          %s732 = smul.addr %s731, 16
          %s733 = scalar_lea.hbm %s5, %s732
          %s735 = sshll.u32 %s717, 4
          %s736 = int_to_ptr.vmem [resolvable:$true] %s735
          %738 = dma.vmem_to_hbm [thread:$0]  %s736, 32, %s733, %s714
        $region48: #{tpu_custom_call.1} parent=39 // pred_fallthru
          _
        // Predicated region
        $region49: #{tpu_custom_call.1} parent=39 // pred_check
          %p739 = pneg %p199
        $region50: #{tpu_custom_call.1} parent=39 // pred_check_branch
          %741 = sbr.rel (%p739) target = $region52
        $region51: #{tpu_custom_call.1} parent=39 // pred_region
          %s742 = smul.u32 2, %s32
          %s744 = ssub.s32 128, 128
          %745 = vsyncadd %s719, %s744
          %s746 = smul.addr %s31, 2
          %s747 = sadd.s32 %s742, %s746
          %s748 = smul.addr %s747, 64
          %s749 = scalar_lea.hbm %s6, %s748
          %s751 = sshll.u32 %s722, 4
          %s752 = int_to_ptr.vmem [resolvable:$true] %s751
          %754 = dma.vmem_to_hbm [thread:$0]  %s752, 128, %s749, %s719
        $region52: #{tpu_custom_call.1} parent=39 // pred_fallthru
          _
      $region40: #{tpu_custom_call.1} parent=5 // pred_fallthru
        _
      %p755 = scmp.le.s32.totalorder 2, %s22
      // Predicated region
      $region53: #{tpu_custom_call.1} parent=5 // pred_check
        %p756 = pneg %p755
      $region54: #{tpu_custom_call.1} parent=5 // pred_check_branch
        %758 = sbr.rel (%p756) target = $region56
      $region55: #{tpu_custom_call.1} parent=5 // pred_region
        %s759 = ssub.s32 %s22, 2
        // Predicated region
        $region57: #{tpu_custom_call.1} parent=55 // pred_check
          %p760 = pneg %p177
        $region58: #{tpu_custom_call.1} parent=55 // pred_check_branch
          %762 = sbr.rel (%p760) target = $region60
        $region59: #{tpu_custom_call.1} parent=55 // pred_region
          %s763 = sand.u32 %s162, 1
          %s764 = scalar_lea.sflag [#allocation4], %s763
          %s765 = sand.u32 %s162, 1
          %s766 = smul.addr %s765, 2
          %s767 = scalar_lea.vmem [#allocation5], %s766
          %768 = dma.done %s764, 32
        $region60: #{tpu_custom_call.1} parent=55 // pred_fallthru
          _
        // Predicated region
        $region61: #{tpu_custom_call.1} parent=55 // pred_check
          %p769 = pneg %p205
        $region62: #{tpu_custom_call.1} parent=55 // pred_check_branch
          %771 = sbr.rel (%p769) target = $region64
        $region63: #{tpu_custom_call.1} parent=55 // pred_region
          %s772 = sand.u32 %s190, 1
          %s773 = scalar_lea.sflag [#allocation7], %s772
          %s774 = sand.u32 %s190, 1
          %s775 = smul.addr %s774, 8
          %s776 = scalar_lea.vmem [#allocation6], %s775
          %777 = dma.done %s773, 128
        $region64: #{tpu_custom_call.1} parent=55 // pred_fallthru
          _
      $region56: #{tpu_custom_call.1} parent=5 // pred_fallthru
        _
    $region6: #{tpu_custom_call.1} parent=1 // loop_footer
      %s26 = sadd.s32 1, %s22
    $region7: #{tpu_custom_call.1} parent=1 // loop_footer_branch
      %21 = sbr.rel target = $region3
    $region8: #{tpu_custom_call.1} parent=1 // loop_exit
      _
    %778 = vsyncpa [#allocation3], 1
    %s779 = scalar_lea.sflag [#allocation3], 1
    %780 = vsyncpa %s779, 1
    %781 = vsyncpa [#allocation4], 1
    %s782 = scalar_lea.sflag [#allocation4], 1
    %783 = vsyncpa %s782, 1
    %784 = vsyncpa [#allocation7], 1
    %s785 = scalar_lea.sflag [#allocation7], 1
    %786 = vsyncpa %s785, 1

</llo_original>
